<compile_context>
chip_gen: v7x
topology: tpu7x:2x2x1
jax: 0.10.0
libtpu: 0.0.40
codegen_flags: <defaults>
</compile_context>

<pallas_src>
import itertools

import jax
import jax.numpy as jnp
import numpy as np
from jax.experimental import pallas as pl
from jax.experimental.pallas import tpu as pltpu

K = 8            # DCT block size (fixed by the module)
BK = K * K       # 64 coefficients per block
PACK = 2         # blocks packed per kernel row -> 128-lane rows (do NOT raise; see notes)
ROW = PACK * BK  # 128
TN_MAX = 4096    # 4096 * 128 * 4B = 2 MiB/buffer; ~8 MiB total double-buffered (< 16 MiB)


def _round_up(x, m):
    return ((x + m - 1) // m) * m


def _build_idct_params():
    """alpha (8,8) and T (8,8,8,8), exactly as the PyTorch module builds them."""
    a = np.array([1.0 / np.sqrt(2)] + [1.0] * 7)
    alpha = np.outer(a, a).astype(np.float32)
    t = np.zeros((K, K, K, K), dtype=np.float32)
    for x, y, u, v in itertools.product(range(K), repeat=4):
        t[x, y, u, v] = np.cos((2 * u + 1) * x * np.pi / 16) * np.cos(
            (2 * v + 1) * y * np.pi / 16)
    return alpha, t


def _build_packed_matrix(alpha, t):
    """(128, 128) block-diagonal matrix with alpha and the 0.25 scale folded in."""
    m = (0.25 * alpha[:, :, None, None] * t).reshape(BK, BK).astype(np.float32)
    m2 = np.zeros((ROW, ROW), dtype=np.float32)
    m2[:BK, :BK] = m
    m2[BK:, BK:] = m
    return jnp.asarray(m2)


def _idct_kernel(x_ref, m_ref, o_ref):
    # x_ref: (tn, 128) -- two flattened 8x8 DCT blocks per row
    # m_ref: (128, 128) block-diagonal IDCT matrix (alpha & 0.25 pre-folded), resident
    # o_ref: (tn, 128)
    # Default f32 matmul precision already meets the 2e-3/2e-2 tolerance vs the PyTorch
    # reference; we intentionally do not force HIGHEST (extra MXU passes hurt v5e).
    y = jnp.dot(x_ref[...], m_ref[...], preferred_element_type=jnp.float32)
    o_ref[...] = (y + 128.0).astype(o_ref.dtype)


def idct_8x8(image, m2):
    """image: (..., 8, 8) DCT coefficients -> (..., 8, 8) spatial-domain blocks."""
    assert image.shape[-2:] == (K, K), image.shape
    # The (tn, 128) BlockSpec rounds row tiles to multiples of 8 sublanes, which is the
    # fp32 tiling minimum; bf16/int8 inputs would need 16/32-row multiples.
    assert image.dtype == jnp.float32, image.dtype

    lead = image.shape[:-2]
    n = 1
    for d in lead:
        n *= int(d)
    if n == 0:
        return image  # empty input: nothing to do

    padded = (n % PACK) != 0
    if padded:
        # Rare path (odd total block count): pad a single zero block.  This is the only
        # case that pays an extra copy; the common even case below is fully copy-free.
        x = image.reshape(n, BK)
        x = jnp.concatenate([x, jnp.zeros((PACK - n % PACK, BK), x.dtype)], axis=0)
        n2 = x.shape[0] // PACK
        x2 = x.reshape(n2, ROW)
    else:
        n2 = n // PACK
        # Memory-order-preserving reshape: a bitcast, no HBM copy.
        x2 = image.reshape(n2, ROW)

    # Row-tile selection: as large as possible (amortize ~0.35us/step and give the DMA
    # engine big transfers), capped at TN_MAX, and arranged so the parallel grid has an
    # even number of steps (>= 2) whenever there is enough work -> both v7x TensorCores
    # get balanced halves.  No padding is needed: pl.cdiv + ragged final block.
    half = -(-n2 // 2)                       # ceil(n2 / 2) = rows per v7x TensorCore
    if half <= 8:
        tn = _round_up(n2, 8)                # tiny input: one step is fine
    else:
        steps_per_core = -(-half // TN_MAX)  # >= 1
        tn = _round_up(-(-half // steps_per_core), 8)  # <= TN_MAX by construction
    grid = pl.cdiv(n2, tn)

    itemsize = jnp.dtype(image.dtype).itemsize
    cost = pl.CostEstimate(
        flops=2 * n2 * ROW * ROW,
        transcendentals=0,
        bytes_accessed=2 * n2 * ROW * itemsize + ROW * ROW * 4,
    )

    out2 = pl.pallas_call(
        _idct_kernel,
        out_shape=jax.ShapeDtypeStruct((n2, ROW), image.dtype),
        grid=(grid,),
        in_specs=[
            pl.BlockSpec((tn, ROW), lambda i: (i, 0)),
            pl.BlockSpec((ROW, ROW), lambda i: (0, 0)),  # constant -> stays resident
        ],
        out_specs=pl.BlockSpec((tn, ROW), lambda i: (i, 0)),
        compiler_params=pltpu.CompilerParams(
            dimension_semantics=("parallel",),
        ),
        cost_estimate=cost,
    )(x2, m2)

    if padded:
        out = out2.reshape(-1, BK)[:n]
        return out.reshape(*lead, K, K)
    # Memory-order-preserving unpack: bitcast, no copy.
    return out2.reshape(*lead, K, K)


def _reference(image, alpha, t):
    # Pure-JAX mirror of the PyTorch forward (image * alpha, tensordot dims=2, *0.25 + 128).
    scaled = image * jnp.asarray(alpha)
    return 0.25 * jnp.tensordot(scaled, jnp.asarray(t), axes=2) + 128.0


if __name__ == "__main__":
    alpha, t = _build_idct_params()
    m2 = _build_packed_matrix(alpha, t)

    key = jax.random.PRNGKey(0)
    batch, n_blocks = 2, 64  # e.g. one 64x64 image worth of 8x8 DCT blocks per batch item
    dcp = jax.random.normal(key, (batch, n_blocks, K, K), dtype=jnp.float32)

    out = idct_8x8(dcp, m2)
    out = jax.block_until_ready(out)

    ref = _reference(dcp, alpha, t)
    assert out.shape == dcp.shape, out.shape
    assert out.dtype == dcp.dtype
    assert jnp.allclose(out, ref, rtol=2e-3, atol=2e-2), float(
        jnp.max(jnp.abs(out - ref)))

    print("KERNEL_OK")
</pallas_src>

<mosaic_0001>
module attributes {stable_mosaic.version = 11 : i64} {
  func.func @_idct_kernel(%arg0: i32, %arg1: memref<32x128xf32, #tpu.memory_space<vmem>>, %arg2: memref<128x128xf32, #tpu.memory_space<vmem>>, %arg3: memref<32x128xf32, #tpu.memory_space<vmem>>) attributes {dimension_semantics = [#tpu.dimension_semantics<parallel>], iteration_bounds = array<i64: 2>, scalar_prefetch = 0 : i64, scratch_operands = 0 : i64, tpu.core_type = #tpu.core_type<tc>, window_params = [{transform_indices = @transform_0, window_bounds = array<i64: 32, 128>}, {pipeline_mode = #tpu.pipeline_mode<synchronous>, transform_indices = @transform_1, window_bounds = array<i64: 128, 128>}, {transform_indices = @transform_2, window_bounds = array<i64: 32, 128>}]} {
    %c0 = arith.constant 0 : index
    %c0_0 = arith.constant 0 : index
    %0 = vector.load %arg1[%c0, %c0_0] : memref<32x128xf32, #tpu.memory_space<vmem>>, vector<32x128xf32>
    %c0_1 = arith.constant 0 : index
    %c0_2 = arith.constant 0 : index
    %1 = vector.load %arg2[%c0_1, %c0_2] : memref<128x128xf32, #tpu.memory_space<vmem>>, vector<128x128xf32>
    %cst = arith.constant dense<0.000000e+00> : vector<32x128xf32>
    %2 = tpu.matmul %0, %1, %cst {dimension_numbers = #tpu.dot_dimension_numbers<[1], [0], [0], [1], [0, 0, 1, 1], [], []>} : vector<32x128xf32>, vector<128x128xf32>, vector<32x128xf32> -> vector<32x128xf32>
    %cst_3 = arith.constant 1.280000e+02 : f32
    %3 = vector.broadcast %cst_3 : f32 to vector<32x128xf32>
    %4 = arith.addf %2, %3 : vector<32x128xf32>
    %c0_4 = arith.constant 0 : index
    %c0_5 = arith.constant 0 : index
    %5 = vector.load %arg3[%c0_4, %c0_5] : memref<32x128xf32, #tpu.memory_space<vmem>>, vector<32x128xf32>
    tpu.vector_store %arg3[%c0_4, %c0_5], %4 {strides = array<i32>} : memref<32x128xf32, #tpu.memory_space<vmem>>, vector<32x128xf32>,
    return
  }
  func.func @transform_0(%arg0: i32) -> (i32, i32) {
    %c0_i32 = arith.constant 0 : i32
    %c0_i32_0 = arith.constant 0 : i32
    return %arg0, %c0_i32 : i32, i32
  }
  func.func @transform_1(%arg0: i32) -> (i32, i32) {
    %c0_i32 = arith.constant 0 : i32
    %c0_i32_0 = arith.constant 0 : i32
    %c0_i32_1 = arith.constant 0 : i32
    return %c0_i32, %c0_i32_0 : i32, i32
  }
  func.func @transform_2(%arg0: i32) -> (i32, i32) {
    %c0_i32 = arith.constant 0 : i32
    %c0_i32_0 = arith.constant 0 : i32
    return %arg0, %c0_i32 : i32, i32
  }
}

</mosaic_0001>

<llo_original>
// kernel: tpu_custom_call.1
$region0: #{tpu_custom_call.1}
  #allocation0 [shape = 'u32[]', space=smem, size = 0x4, offset = 0x4, fixed_abs, tag = 'smem constant byte address 0x4 - core index']
  #allocation1 [shape = 'u32[144,128]{1,0:T(1,128)}', space=vmem, size = 0x12000, scoped, tag = 'internal scratch']
  %s0 = inlined_call_operand.hbm [shape: f32[64,128], index: 0, kind: input, shape index: {}]
  %s1 = inlined_call_operand.hbm [shape: f32[128,128], index: 1, kind: input, shape index: {}]
  %s2 = inlined_call_operand.hbm [shape: f32[64,128], index: 2, kind: output, shape index: {}]
  %s3 = sld [smem:[#allocation0]]
  $region49: #{tpu_custom_call.1} parent=0
    _
  %s5 = ssub.s32 1, %s3
  %s6 = scalar_select 0, %s5, %s3
  $region1: #{tpu_custom_call.1} parent=0
    #allocation2 [shape = 'u8[32768]{0}', space=vmem, size = 0x8000, scoped, tag = 'input window, operand 0']
    #allocation3 [shape = 's32[2]{0}', space=sflag, size = 0x8, scoped, tag = 'scoped memory for tpu_custom_call.1']
    #allocation4 [shape = 's32[2]{0}', space=sflag, size = 0x8, scoped, tag = 'scoped memory for tpu_custom_call.1']
    #allocation5 [shape = 'u8[65536]{0}', space=vmem, size = 0x10000, scoped, tag = 'input window, operand 1, single buffered']
    #allocation6 [shape = 's32[1]{0}', space=sflag, size = 0x4, scoped, tag = 'scoped memory for tpu_custom_call.1']
    #allocation7 [shape = 'u8[32768]{0}', space=vmem, size = 0x8000, scoped, tag = 'output window, operand 0']
    %7 = vsyncpa [#allocation3], 0
    %s8 = scalar_lea.sflag [#allocation3], 1
    %9 = vsyncpa %s8, 0
    %10 = vsyncpa [#allocation6], 0
    %11 = vsyncpa [#allocation4], 0
    %s12 = scalar_lea.sflag [#allocation4], 1
    %13 = vsyncpa %s12, 0
    loop: start=0, step=1, limit=4
    $region2: #{tpu_custom_call.1} parent=1 // loop_pre_header
      _
    $region3: #{tpu_custom_call.1} parent=1 // loop_header
      %s15 = sphi 0, %s19
      %p16 = scmp.ge.s32.totalorder %s15, 4
      %s25 = sphi 0, %s27
      %s28 = sphi 0, %s25
      %s29 = sphi 0, %s28
      %s45 = sphi 0, %s29
      %s49 = sphi 0, %s49
      %s51 = sphi 0, %s49
      %s52 = sphi 0, %s51
      %s66 = sphi 0, %s52
      %s72 = sphi 0, %s74
      %s75 = sphi 0, %s72
      %s76 = sphi 0, %s75
      %s92 = sphi 0, %s76
    $region4: #{tpu_custom_call.1} parent=1 // loop_header_branch
      %18 = sbr.rel (%p16) target = $region8
    $region5: #{tpu_custom_call.1} parent=1 // loop_body
      %s20 = ssub.s32 %s15, 1
      %s21 = ssub.s32 %s15, 2
      %s22 = sadd.s32 %s15, 1
      %s23 = ssub.s32 %s15, %s22
      %p24 = scmp.eq.s32.totalorder %s23, 0
      %s26 = sadd.s32 %s25, 1
      %s27 = scalar_select %p24, %s25, %s26
      %p30 = pneg %p24
      %p31 = scmp.eq.s32.totalorder %s15, 1
      %p32 = por %p30, %p31
      %p33 = scmp.ne.s32.totalorder %s25, %s28
      %p34 = scmp.eq.s32.totalorder %s15, 0
      %p35 = por %p33, %p34
      %p36 = scmp.ne.s32.totalorder %s25, %s28
      %p37 = scmp.eq.s32.totalorder %s20, 1
      %p38 = por %p36, %p37
      %p39 = scmp.ne.s32.totalorder %s28, %s29
      %p40 = scmp.eq.s32.totalorder %s20, 0
      %p41 = por %p39, %p40
      %p42 = scmp.ne.s32.totalorder %s28, %s29
      %p43 = scmp.eq.s32.totalorder %s21, 1
      %p44 = por %p42, %p43
      %p46 = scmp.ne.s32.totalorder %s29, %s45
      %p47 = scmp.eq.s32.totalorder %s21, 0
      %p48 = por %p46, %p47
      %s50 = sadd.s32 %s49, 1
      %p53 = scmp.eq.s32.totalorder %s15, 1
      %p54 = scmp.ne.s32.totalorder %s49, %s51
      %p55 = scmp.eq.s32.totalorder %s15, 0
      %p56 = por %p54, %p55
      %p57 = scmp.ne.s32.totalorder %s49, %s51
      %p58 = scmp.eq.s32.totalorder %s20, 1
      %p59 = por %p57, %p58
      %p60 = scmp.ne.s32.totalorder %s51, %s52
      %p61 = scmp.eq.s32.totalorder %s20, 0
      %p62 = por %p60, %p61
      %p63 = scmp.ne.s32.totalorder %s51, %s52
      %p64 = scmp.eq.s32.totalorder %s21, 1
      %p65 = por %p63, %p64
      %p67 = scmp.ne.s32.totalorder %s52, %s66
      %p68 = scmp.eq.s32.totalorder %s21, 0
      %p69 = por %p67, %p68
      %s70 = ssub.s32 %s15, %s22
      %p71 = scmp.eq.s32.totalorder %s70, 0
      %s73 = sadd.s32 %s72, 1
      %s74 = scalar_select %p71, %s72, %s73
      %p77 = pneg %p71
      %p78 = scmp.eq.s32.totalorder %s15, 1
      %p79 = por %p77, %p78
      %p80 = scmp.ne.s32.totalorder %s72, %s75
      %p81 = scmp.eq.s32.totalorder %s15, 0
      %p82 = por %p80, %p81
      %p83 = scmp.ne.s32.totalorder %s72, %s75
      %p84 = scmp.eq.s32.totalorder %s20, 1
      %p85 = por %p83, %p84
      %p86 = scmp.ne.s32.totalorder %s75, %s76
      %p87 = scmp.eq.s32.totalorder %s20, 0
      %p88 = por %p86, %p87
      %p89 = scmp.ne.s32.totalorder %s75, %s76
      %p90 = scmp.eq.s32.totalorder %s21, 1
      %p91 = por %p89, %p90
      %p93 = scmp.ne.s32.totalorder %s76, %s92
      %p94 = scmp.eq.s32.totalorder %s21, 0
      %p95 = por %p93, %p94
      %p96 = scmp.le.s32.totalorder 1, %s15
      %p97 = scmp.lt.s32.totalorder %s15, 3
      %p98 = pnand %p96, %p97
      %p99 = pneg %p98
      // Predicated region
      $region9: #{tpu_custom_call.1} parent=5 // pred_check
        _
      $region10: #{tpu_custom_call.1} parent=5 // pred_check_branch
        %101 = sbr.rel (%p98) target = $region12
      $region11: #{tpu_custom_call.1} parent=5 // pred_region
        %s102 = ssub.s32 %s15, 1
        // Predicated region
        $region13: #{tpu_custom_call.1} parent=11 // pred_check
          %p103 = pneg %p62
        $region14: #{tpu_custom_call.1} parent=11 // pred_check_branch
          %105 = sbr.rel (%p103) target = $region16
        $region15: #{tpu_custom_call.1} parent=11 // pred_region
          %s107 = ssub.s32 2048, 2048
          %108 = vsyncadd [#allocation6], %s107
          %s109 = sshll.u32 [#allocation5], 4
          %s110 = int_to_ptr.vmem [resolvable:$true] %s109
          %115 = dma.hbm_to_vmem [thread:$0]  %s1, 2048, %s110, [#allocation6], 128, 128, 8
        $region16: #{tpu_custom_call.1} parent=11 // pred_fallthru
          _
      $region12: #{tpu_custom_call.1} parent=5 // pred_fallthru
        _
      %p116 = scmp.lt.s32.totalorder %s15, 2
      // Predicated region
      $region17: #{tpu_custom_call.1} parent=5 // pred_check
        %p117 = pneg %p116
      $region18: #{tpu_custom_call.1} parent=5 // pred_check_branch
        %119 = sbr.rel (%p117) target = $region20
      $region19: #{tpu_custom_call.1} parent=5 // pred_region
        // Predicated region
        $region21: #{tpu_custom_call.1} parent=19 // pred_check
          %p120 = pneg %p35
        $region22: #{tpu_custom_call.1} parent=19 // pred_check_branch
          %122 = sbr.rel (%p120) target = $region24
        $region23: #{tpu_custom_call.1} parent=19 // pred_region
          %s123 = sand.u32 %s25, 1
          %s124 = scalar_lea.sflag [#allocation3], %s123
          %s125 = sand.u32 %s25, 1
          %s126 = smul.addr %s125, 32
          %s127 = scalar_lea.vmem [#allocation2], %s126
          %s128 = smul.u32 4, %s15
          %s130 = ssub.s32 512, 512
          %131 = vsyncadd %s124, %s130
          %s132 = smul.addr %s128, 128
          %s133 = scalar_lea.hbm %s0, %s132
          %s134 = sshll.u32 %s127, 4
          %s135 = int_to_ptr.vmem [resolvable:$true] %s134
          %140 = dma.hbm_to_vmem [thread:$0]  %s133, 512, %s135, %s124, 128, 128, 8
        $region24: #{tpu_custom_call.1} parent=19 // pred_fallthru
          _
      $region20: #{tpu_custom_call.1} parent=5 // pred_fallthru
        _
      %p141 = scmp.le.s32.totalorder 1, %s15
      %p142 = scmp.lt.s32.totalorder %s15, 3
      %p143 = pnand %p141, %p142
      %p144 = pneg %p143
      // Predicated region
      $region25: #{tpu_custom_call.1} parent=5 // pred_check
        _
      $region26: #{tpu_custom_call.1} parent=5 // pred_check_branch
        %146 = sbr.rel (%p143) target = $region28
      $region27: #{tpu_custom_call.1} parent=5 // pred_region
        %s147 = ssub.s32 %s15, 1
        %s148 = sand.u32 %s28, 1
        %s149 = scalar_lea.sflag [#allocation3], %s148
        %s150 = sand.u32 %s28, 1
        %s151 = smul.addr %s150, 32
        %s152 = scalar_lea.vmem [#allocation2], %s151
        // Predicated region
        $region29: #{tpu_custom_call.1} parent=27 // pred_check
          %p153 = pneg %p41
        $region30: #{tpu_custom_call.1} parent=27 // pred_check_branch
          %155 = sbr.rel (%p153) target = $region32
        $region31: #{tpu_custom_call.1} parent=27 // pred_region
          %156 = dma.done %s149, 512
        $region32: #{tpu_custom_call.1} parent=27 // pred_fallthru
          _
        // Predicated region
        $region33: #{tpu_custom_call.1} parent=27 // pred_check
          %p157 = pneg %p62
        $region34: #{tpu_custom_call.1} parent=27 // pred_check_branch
          %159 = sbr.rel (%p157) target = $region36
        $region35: #{tpu_custom_call.1} parent=27 // pred_region
          %160 = dma.done [#allocation6], 2048
        $region36: #{tpu_custom_call.1} parent=27 // pred_fallthru
          _
        %s161 = sand.u32 %s28, 1
        %s162 = scalar_lea.sflag [#allocation3], %s161
        %s163 = sand.u32 %s28, 1
        %s164 = smul.addr %s163, 32
        %s165 = scalar_lea.vmem [#allocation2], %s164
        %p166 = pneg %p41
        %p167 = pneg %p38
        %p168 = pneg %p62
        %p169 = pneg %p59
        %p170 = pneg %p88
        %p171 = pneg %p85
        %s172 = sand.u32 %s75, 1
        %s173 = scalar_lea.sflag [#allocation4], %s172
        %s174 = sand.u32 %s75, 1
        %s175 = smul.addr %s174, 32
        %s176 = scalar_lea.vmem [#allocation7], %s175
        %s177 = smul.u32 4, %s20
        %s178 = smul.u32 4, %s20
        %v179 = vld [vmem:[%s152] sm:$0xff]
        %v180 = vld [vmem:[%s152 + $0x8] sm:$0xff]
        %v181 = vld [vmem:[%s152 + $0x10] sm:$0xff]
        %v182 = vld [vmem:[%s152 + $0x18] sm:$0xff]
        %v183 = vld [vmem:[#allocation5] sm:$0xff]
        %v184 = vld [vmem:[#allocation5 + $0x8] sm:$0xff]
        %v185 = vld [vmem:[#allocation5 + $0x10] sm:$0xff]
        %v186 = vld [vmem:[#allocation5 + $0x18] sm:$0xff]
        %v187 = vld [vmem:[#allocation5 + $0x20] sm:$0xff]
        %v188 = vld [vmem:[#allocation5 + $0x28] sm:$0xff]
        %v189 = vld [vmem:[#allocation5 + $0x30] sm:$0xff]
        %v190 = vld [vmem:[#allocation5 + $0x38] sm:$0xff]
        %v191 = vld [vmem:[#allocation5 + $0x40] sm:$0xff]
        %v192 = vld [vmem:[#allocation5 + $0x48] sm:$0xff]
        %v193 = vld [vmem:[#allocation5 + $0x50] sm:$0xff]
        %v194 = vld [vmem:[#allocation5 + $0x58] sm:$0xff]
        %v195 = vld [vmem:[#allocation5 + $0x60] sm:$0xff]
        %v196 = vld [vmem:[#allocation5 + $0x68] sm:$0xff]
        %v197 = vld [vmem:[#allocation5 + $0x70] sm:$0xff]
        %v198 = vld [vmem:[#allocation5 + $0x78] sm:$0xff]
        %199 = vmatprep.subr.mxu0 0.0
        %200 = vmatpush1.msra.mxu0 %v183
        %201 = vmatprep.subr.mxu0 0.0
        %202 = vmatpush1.msra.mxu0 %v184
        %203 = vmatprep.subr.mxu0 0.0
        %204 = vmatpush1.msra.mxu0 %v185
        %205 = vmatprep.subr.mxu0 0.0
        %206 = vmatpush1.msra.mxu0 %v186
        %207 = vmatprep.subr.mxu0 0.0
        %208 = vmatpush1.msra.mxu0 %v187
        %209 = vmatprep.subr.mxu0 0.0
        %210 = vmatpush1.msra.mxu0 %v188
        %211 = vmatprep.subr.mxu0 0.0
        %212 = vmatpush1.msra.mxu0 %v189
        %213 = vmatprep.subr.mxu0 0.0
        %214 = vmatpush1.msra.mxu0 %v190
        %215 = vmatprep.subr.mxu0 0.0
        %216 = vmatpush1.msra.mxu0 %v191
        %217 = vmatprep.subr.mxu0 0.0
        %218 = vmatpush1.msra.mxu0 %v192
        %219 = vmatprep.subr.mxu0 0.0
        %220 = vmatpush1.msra.mxu0 %v193
        %221 = vmatprep.subr.mxu0 0.0
        %222 = vmatpush1.msra.mxu0 %v194
        %223 = vmatprep.subr.mxu0 0.0
        %224 = vmatpush1.msra.mxu0 %v195
        %225 = vmatprep.subr.mxu0 0.0
        %226 = vmatpush1.msra.mxu0 %v196
        %227 = vmatprep.subr.mxu0 0.0
        %228 = vmatpush1.msra.mxu0 %v197
        %229 = vmatprep.subr.mxu0 0.0
        %230 = vmatpush1.msra.mxu0 %v198
        %231 = vmatprep.subr.mxu0 0.0
        %232 = vmatpush1.msra.mxu0 0.0
        %233 = vmatprep.subr.mxu0 0.0
        %234 = vmatpush1.msra.mxu0 0.0
        %235 = vmatprep.subr.mxu0 0.0
        %236 = vmatpush1.msra.mxu0 0.0
        %237 = vmatprep.subr.mxu0 0.0
        %238 = vmatpush1.msra.mxu0 0.0
        %239 = vmatprep.subr.mxu0 0.0
        %240 = vmatpush1.msra.mxu0 0.0
        %241 = vmatprep.subr.mxu0 0.0
        %242 = vmatpush1.msra.mxu0 0.0
        %243 = vmatprep.subr.mxu0 0.0
        %244 = vmatpush1.msra.mxu0 0.0
        %245 = vmatprep.subr.mxu0 0.0
        %246 = vmatpush1.msra.mxu0 0.0
        %247 = vmatprep.subr.mxu0 0.0
        %248 = vmatpush1.msra.mxu0 0.0
        %249 = vmatprep.subr.mxu0 0.0
        %250 = vmatpush1.msra.mxu0 0.0
        %251 = vmatprep.subr.mxu0 0.0
        %252 = vmatpush1.msra.mxu0 0.0
        %253 = vmatprep.subr.mxu0 0.0
        %254 = vmatpush1.msra.mxu0 0.0
        %255 = vmatprep.subr.mxu0 0.0
        %256 = vmatpush1.msra.mxu0 0.0
        %257 = vmatprep.subr.mxu0 0.0
        %258 = vmatpush1.msra.mxu0 0.0
        %259 = vmatprep.subr.mxu0 0.0
        %260 = vmatpush1.msra.mxu0 0.0
        %261 = vmatprep.subr.mxu0 0.0
        %262 = vmatpush1.msra.mxu0 0.0
        %263 = vmatprep.mubr.f32.mxu0 0.0
        %264 = vmatmul.mubr.f32.gmra.mrb[0].mxu0 %v179
        %v265 = vpop.f32.mrb[0].mxu0
        %v266 = vadd.f32 128.0, %v265
        %v267 = vpop.f32.mrb[0].mxu0
        %268 = vmatprep.mubr.f32.mxu0 0.0
        %269 = vmatmul.mubr.f32.gmra.mrb[0].mxu0 %v180
        %v270 = vpop.f32.mrb[0].mxu0
        %v271 = vadd.f32 128.0, %v270
        %v272 = vpop.f32.mrb[0].mxu0
        %273 = vmatprep.mubr.f32.mxu0 0.0
        %274 = vmatmul.mubr.f32.gmra.mrb[0].mxu0 %v181
        %v275 = vpop.f32.mrb[0].mxu0
        %v276 = vadd.f32 128.0, %v275
        %v277 = vpop.f32.mrb[0].mxu0
        %278 = vmatprep.mubr.f32.mxu0 0.0
        %279 = vmatmul.mubr.f32.gmra.mrb[0].mxu0 %v182
        %v280 = vpop.f32.mrb[0].mxu0
        %v281 = vadd.f32 128.0, %v280
        %v282 = vpop.f32.mrb[0].mxu0
        %283 = vdwg.mxu0
        %284 = vst [vmem:[%s176] sm:$0xff] %v266
        %285 = vst [vmem:[%s176 + $0x8] sm:$0xff] %v271
        %286 = vst [vmem:[%s176 + $0x10] sm:$0xff] %v276
        %287 = vst [vmem:[%s176 + $0x18] sm:$0xff] %v281
        %s288 = sand.u32 %s75, 1
        %s289 = scalar_lea.sflag [#allocation4], %s288
        %s290 = sand.u32 %s75, 1
        %s291 = smul.addr %s290, 32
        %s292 = scalar_lea.vmem [#allocation7], %s291
        // Predicated region
        $region37: #{tpu_custom_call.1} parent=27 // pred_check
          %p293 = pneg %p85
        $region38: #{tpu_custom_call.1} parent=27 // pred_check_branch
          %295 = sbr.rel (%p293) target = $region40
        $region39: #{tpu_custom_call.1} parent=27 // pred_region
          %s296 = smul.u32 4, %s20
          %s298 = ssub.s32 512, 512
          %299 = vsyncadd %s289, %s298
          %s300 = smul.addr %s296, 128
          %s301 = scalar_lea.hbm %s2, %s300
          %s302 = sshll.u32 %s292, 4
          %s303 = int_to_ptr.vmem [resolvable:$true] %s302
          %308 = dma.vmem_to_hbm [thread:$0]  %s303, 512, %s301, %s289, 128, 128, 8
        $region40: #{tpu_custom_call.1} parent=27 // pred_fallthru
          _
      $region28: #{tpu_custom_call.1} parent=5 // pred_fallthru
        _
      %p309 = scmp.le.s32.totalorder 2, %s15
      // Predicated region
      $region41: #{tpu_custom_call.1} parent=5 // pred_check
        %p310 = pneg %p309
      $region42: #{tpu_custom_call.1} parent=5 // pred_check_branch
        %312 = sbr.rel (%p310) target = $region44
      $region43: #{tpu_custom_call.1} parent=5 // pred_region
        %s313 = ssub.s32 %s15, 2
        // Predicated region
        $region45: #{tpu_custom_call.1} parent=43 // pred_check
          %p314 = pneg %p91
        $region46: #{tpu_custom_call.1} parent=43 // pred_check_branch
          %316 = sbr.rel (%p314) target = $region48
        $region47: #{tpu_custom_call.1} parent=43 // pred_region
          %s317 = sand.u32 %s76, 1
          %s318 = scalar_lea.sflag [#allocation4], %s317
          %s319 = sand.u32 %s76, 1
          %s320 = smul.addr %s319, 32
          %s321 = scalar_lea.vmem [#allocation7], %s320
          %322 = dma.done %s318, 512
        $region48: #{tpu_custom_call.1} parent=43 // pred_fallthru
          _
      $region44: #{tpu_custom_call.1} parent=5 // pred_fallthru
        _
    $region6: #{tpu_custom_call.1} parent=1 // loop_footer
      %s19 = sadd.s32 1, %s15
    $region7: #{tpu_custom_call.1} parent=1 // loop_footer_branch
      %14 = sbr.rel target = $region3
    $region8: #{tpu_custom_call.1} parent=1 // loop_exit
      _
    %323 = vsyncpa [#allocation3], 1
    %s324 = scalar_lea.sflag [#allocation3], 1
    %325 = vsyncpa %s324, 1
    %326 = vsyncpa [#allocation6], 1
    %327 = vsyncpa [#allocation4], 1
    %s328 = scalar_lea.sflag [#allocation4], 1
    %329 = vsyncpa %s328, 1

</llo_original>
